<compile_context>
chip_gen: v6e
topology: v6e:2x2x1
jax: 0.10.0
libtpu: 0.0.40
codegen_flags: <defaults>
</compile_context>

<pallas_src>
import functools

import jax
import jax.numpy as jnp
from jax.experimental import pallas as pl
from jax.experimental.pallas import tpu as pltpu


# ---------------------------------------------------------------------------
# helpers
# ---------------------------------------------------------------------------
def _round_up(x, m):
    return ((x + m - 1) // m) * m


def _divisors(n):
    return [d for d in range(1, n + 1) if n % d == 0]


def _vmem_policy():
    """Returns (per-block byte budget, scoped vmem_limit_bytes).

    Generation-aware: 2 specs x 2 buffers x block must stay well under the
    scoped VMEM limit we request, and that limit must stay well under physical
    VMEM (v5e/v6e: 128 MiB, v7x: 64 MiB per TensorCore; scoped default is
    16 MiB on v5e and 32 MiB on v6e/v7x).
    """
    try:
        kind = jax.devices()[0].device_kind.lower()
    except Exception:  # pragma: no cover - CPU fallback during tracing
        kind = ""
    if "v6" in kind:
        return 6 << 20, 40 << 20          # 4*6=24 MiB buffers < 40 MiB scoped
    if "v7" in kind:
        return 4 << 20, 40 << 20          # 40 MiB << 64 MiB physical (headroom)
    # v5e / unknown: keep blocks modest and the scoped limit conservative.
    return 3 << 20, 24 << 20


def _choose_cf_tiling(N, C, HW_blk, itemsize, budget, lane_tileable):
    """Pick (nb, T) = (batch elems per block, lane-tile width).

    Maximizes block bytes under `budget` while keeping >= 2 grid steps whenever
    the problem admits them (so v7x megacore sharding has work for both TCs).
    """
    if lane_tileable:
        t_opts = [128 * d for d in _divisors(HW_blk // 128)]
    else:
        t_opts = [HW_blk]                 # full-dim lane block (legal)
    nb_opts = _divisors(N)
    min_t = min(t_opts)
    max_steps = N * (HW_blk // min_t)
    min_steps = 2 if max_steps >= 2 else 1
    best, best_bytes = (1, min_t), -1
    for nb in nb_opts:
        for t in t_opts:
            blk = nb * C * t * itemsize
            steps = (N // nb) * (HW_blk // t)
            if blk <= budget and steps >= min_steps and blk > best_bytes:
                best_bytes, best = blk, (nb, t)
    return best


def _choose_cl_tiling(rows, C, itemsize, budget, row_tileable):
    """Pick TR (rows per block) for the channels_last path."""
    if row_tileable:
        t_opts = [8 * d for d in _divisors(rows // 8)]
    else:
        t_opts = [rows]
    min_t = min(t_opts)
    max_steps = rows // min_t
    min_steps = 2 if max_steps >= 2 else 1
    best, best_bytes = min_t, -1
    for t in t_opts:
        blk = t * C * itemsize
        steps = rows // t
        if blk <= budget and steps >= min_steps and blk > best_bytes:
            best_bytes, best = blk, t
    return best


# ---------------------------------------------------------------------------
# channels_first LayerNorm (reduce over C), optionally fused with ReLU
# ---------------------------------------------------------------------------
def _layernorm_cf_kernel(x_ref, w_ref, b_ref, o_ref, *, eps, inv_c, fuse_relu):
    # x_ref: (nb, C, T) block.  Two-pass centered moments over the channel
    # axis (biased variance) — exactly the PyTorch channels_first branch, and
    # numerically robust (no E[x^2]-E[x]^2 cancellation).  Memory-bound, so the
    # extra VALU pass is free.
    x = x_ref[...].astype(jnp.float32)                       # (nb, C, T)
    mean = jnp.sum(x, axis=1, keepdims=True) * inv_c         # (nb, 1, T)
    d = x - mean
    var = jnp.sum(d * d, axis=1, keepdims=True) * inv_c
    r = jax.lax.rsqrt(var + eps)                             # EUP
    w = w_ref[...].astype(jnp.float32)[None, :, :]           # (1, C, 1)
    b = b_ref[...].astype(jnp.float32)[None, :, :]           # (1, C, 1)
    y = d * r * w + b
    if fuse_relu:
        y = jnp.maximum(y, 0.0)
    o_ref[...] = y.astype(o_ref.dtype)


def layernorm_channels_first(x, weight, bias, eps=1e-6, fuse_relu=False):
    """x: (N, C, H, W); weight, bias: (C,). Returns (N, C, H, W)."""
    N, C, H, W = x.shape
    HW = H * W
    itemsize = jnp.dtype(x.dtype).itemsize
    budget, vmem_limit = _vmem_policy()

    x_flat = x.reshape(N, C, HW)

    padded = False
    if HW % 128 == 0:
        HW_blk, lane_tileable = HW, True
    elif C * HW * itemsize <= budget:
        # Full-dim lane block: legal under the (8,128) rule, avoids an extra
        # pad+slice HBM round trip on a memory-bound op.
        HW_blk, lane_tileable = HW, False
    else:
        # TODO(synk): very large non-128-multiple HW still pays a pad/slice HBM
        # round trip; a masked-last-tile kernel would remove it.
        HW_blk = _round_up(HW, 128)
        x_flat = jnp.pad(x_flat, ((0, 0), (0, 0), (0, HW_blk - HW)))
        padded, lane_tileable = True, True

    nb, T = _choose_cf_tiling(N, C, HW_blk, itemsize, budget, lane_tileable)
    grid = (N // nb, HW_blk // T)

    w2 = weight.reshape(C, 1).astype(jnp.float32)
    b2 = bias.reshape(C, 1).astype(jnp.float32)

    kernel = functools.partial(_layernorm_cf_kernel, eps=eps,
                               inv_c=1.0 / C, fuse_relu=fuse_relu)
    cost = pl.CostEstimate(
        flops=int(9 * N * C * HW_blk),
        transcendentals=int(N * HW_blk),
        bytes_accessed=int(2 * N * C * HW_blk * itemsize),
    )
    # TODO(synk): allow_input_fusion for the x operand could fold conv1's
    # bias-add into the Pallas input read; left off to keep lowering robust.
    out = pl.pallas_call(
        kernel,
        out_shape=jax.ShapeDtypeStruct((N, C, HW_blk), x.dtype),
        grid_spec=pltpu.PrefetchScalarGridSpec(
            num_scalar_prefetch=0,
            grid=grid,
            in_specs=[
                pl.BlockSpec((nb, C, T), lambda n, t: (n, 0, t)),
                pl.BlockSpec((C, 1), lambda n, t: (0, 0)),
                pl.BlockSpec((C, 1), lambda n, t: (0, 0)),
            ],
            out_specs=pl.BlockSpec((nb, C, T), lambda n, t: (n, 0, t)),
        ),
        compiler_params=pltpu.CompilerParams(
            dimension_semantics=("parallel", "parallel"),
            vmem_limit_bytes=vmem_limit),
        cost_estimate=cost,
    )(x_flat, w2, b2)
    if padded:
        out = out[:, :, :HW]
    return out.reshape(N, C, H, W)


# ---------------------------------------------------------------------------
# channels_last LayerNorm (reduce over last axis), tiled over rows
# ---------------------------------------------------------------------------
def _layernorm_cl_kernel(x_ref, w_ref, b_ref, o_ref, *, eps, inv_c):
    x = x_ref[...].astype(jnp.float32)                       # (TR, C)
    mean = jnp.sum(x, axis=-1, keepdims=True) * inv_c
    d = x - mean
    var = jnp.sum(d * d, axis=-1, keepdims=True) * inv_c
    r = jax.lax.rsqrt(var + eps)
    w = w_ref[...].astype(jnp.float32)                       # (1, C)
    b = b_ref[...].astype(jnp.float32)
    o_ref[...] = (d * r * w + b).astype(o_ref.dtype)


def layernorm_channels_last(x, weight, bias, eps=1e-6):
    """x: (..., C); weight, bias: (C,). Returns same shape as x.

    Note: when C < 128 the output stores are lane-masked (vst.msk); prefer the
    channels_first path (lane-dense over HW) for performance-critical shapes.
    """
    orig_shape = x.shape
    C = orig_shape[-1]
    rows = 1
    for d in orig_shape[:-1]:
        rows *= d
    itemsize = jnp.dtype(x.dtype).itemsize
    budget, vmem_limit = _vmem_policy()

    x_flat = x.reshape(rows, C)

    padded = False
    if rows % 8 == 0:
        rows_blk, row_tileable = rows, True
    elif rows * C * itemsize <= budget:
        rows_blk, row_tileable = rows, False     # full-dim row block
    else:
        rows_blk = _round_up(rows, 8)
        x_flat = jnp.pad(x_flat, ((0, rows_blk - rows), (0, 0)))
        padded, row_tileable = True, True

    TR = _choose_cl_tiling(rows_blk, C, itemsize, budget, row_tileable)
    grid = (rows_blk // TR,)

    w2 = weight.reshape(1, C).astype(jnp.float32)
    b2 = bias.reshape(1, C).astype(jnp.float32)

    kernel = functools.partial(_layernorm_cl_kernel, eps=eps, inv_c=1.0 / C)
    cost = pl.CostEstimate(
        flops=int(9 * rows_blk * C),
        transcendentals=int(rows_blk),
        bytes_accessed=int(2 * rows_blk * C * itemsize),
    )
    out = pl.pallas_call(
        kernel,
        out_shape=jax.ShapeDtypeStruct((rows_blk, C), x.dtype),
        grid_spec=pltpu.PrefetchScalarGridSpec(
            num_scalar_prefetch=0,
            grid=grid,
            in_specs=[
                pl.BlockSpec((TR, C), lambda i: (i, 0)),
                pl.BlockSpec((1, C), lambda i: (0, 0)),
                pl.BlockSpec((1, C), lambda i: (0, 0)),
            ],
            out_specs=pl.BlockSpec((TR, C), lambda i: (i, 0)),
        ),
        compiler_params=pltpu.CompilerParams(
            dimension_semantics=("parallel",),
            vmem_limit_bytes=vmem_limit),
        cost_estimate=cost,
    )(x_flat, w2, b2)
    if padded:
        out = out[:rows]
    return out.reshape(orig_shape)


class LayerNormPallas:
    """Mirrors the PyTorch LayerNorm module (default data_format='channels_first')."""

    def __init__(self, normalized_shape, eps=1e-6, data_format="channels_first"):
        if data_format not in ("channels_last", "channels_first"):
            raise NotImplementedError
        self.weight = jnp.ones((normalized_shape,), jnp.float32)
        self.bias = jnp.zeros((normalized_shape,), jnp.float32)
        self.eps = eps
        self.data_format = data_format

    def __call__(self, x):
        if self.data_format == "channels_last":
            return layernorm_channels_last(x, self.weight, self.bias, self.eps)
        return layernorm_channels_first(x, self.weight, self.bias, self.eps)


# ---------------------------------------------------------------------------
# re_head: Conv3x3(pad1) -> LayerNorm(cf)+ReLU (Pallas) -> Conv3x3(pad0), x3
# ---------------------------------------------------------------------------
def conv2d(x, w, b, padding):
    out = jax.lax.conv_general_dilated(
        x, w, window_strides=(1, 1),
        padding=((padding, padding), (padding, padding)),
        dimension_numbers=("NCHW", "OIHW", "NCHW"))
    return out + b[None, :, None, None]


def _kaiming(key, shape):
    fan_in = shape[1] * shape[2] * shape[3]
    return jax.random.normal(key, shape, jnp.float32) * jnp.sqrt(2.0 / fan_in)


class ReHeadPallas:
    """re_head: head_{4,8,16} = ConvBNReLu(cin, 48) -> Conv2d(48, 3, 3, 1, 0)."""

    def __init__(self, key):
        ks = jax.random.split(key, 6)
        self.params = {}
        for name, cin, k1, k2 in (("4", 48, ks[0], ks[1]),
                                  ("8", 96, ks[2], ks[3]),
                                  ("16", 384, ks[4], ks[5])):
            self.params[name] = dict(
                conv1_w=_kaiming(k1, (48, cin, 3, 3)),
                conv1_b=jnp.zeros((48,), jnp.float32),
                ln_w=jnp.ones((48,), jnp.float32),
                ln_b=jnp.zeros((48,), jnp.float32),
                conv2_w=_kaiming(k2, (3, 48, 3, 3)),
                conv2_b=jnp.zeros((3,), jnp.float32),
            )

    def _head(self, x, p):
        # TODO(synk): the 3x3 convolutions are lowered via lax.conv (XLA), not a
        # hand-written Pallas kernel.
        x = conv2d(x, p["conv1_w"], p["conv1_b"], padding=1)
        # LayerNorm (channels_first) + ReLU fused in one Pallas kernel.
        x = layernorm_channels_first(x, p["ln_w"], p["ln_b"], eps=1e-6,
                                     fuse_relu=True)
        x = conv2d(x, p["conv2_w"], p["conv2_b"], padding=0)
        return x

    def __call__(self, fuse_4, fuse_8, fuse_16):
        return (self._head(fuse_4, self.params["4"]),
                self._head(fuse_8, self.params["8"]),
                self._head(fuse_16, self.params["16"]))


# ---------------------------------------------------------------------------
# pure-JAX references
# ---------------------------------------------------------------------------
def _reference_ln_cf(x, weight, bias, eps):
    u = jnp.mean(x, axis=1, keepdims=True)
    s = jnp.mean((x - u) ** 2, axis=1, keepdims=True)
    y = (x - u) / jnp.sqrt(s + eps)
    return weight[None, :, None, None] * y + bias[None, :, None, None]


def _reference_ln_cl(x, weight, bias, eps):
    u = jnp.mean(x, axis=-1, keepdims=True)
    s = jnp.mean((x - u) ** 2, axis=-1, keepdims=True)
    return (x - u) / jnp.sqrt(s + eps) * weight + bias


def _reference_head(x, p, eps=1e-6):
    x = conv2d(x, p["conv1_w"], p["conv1_b"], padding=1)
    x = jnp.maximum(_reference_ln_cf(x, p["ln_w"], p["ln_b"], eps), 0.0)
    x = conv2d(x, p["conv2_w"], p["conv2_b"], padding=0)
    return x


if __name__ == "__main__":
    key = jax.random.PRNGKey(0)
    k_in, k_par, k_ln, k_cl = jax.random.split(key, 4)

    # --- standalone LayerNorm kernel checks (non-trivial affine) ------------
    N, C, H, W = 2, 4, 16, 16
    x = jax.random.normal(k_ln, (N, C, H, W), jnp.float32)
    ln = LayerNormPallas(C, eps=1e-6, data_format="channels_first")
    ln.weight = jnp.linspace(0.5, 1.5, C, dtype=jnp.float32)
    ln.bias = jnp.linspace(-0.2, 0.2, C, dtype=jnp.float32)
    out = jax.block_until_ready(ln(x))
    ref = _reference_ln_cf(x, ln.weight, ln.bias, ln.eps)
    assert out.shape == (N, C, H, W)
    assert jnp.max(jnp.abs(out - ref)) < 1e-4, "channels_first LN mismatch"

    # Non-128-multiple spatial size exercises the full-dim (no-pad) lane block.
    x_odd = jax.random.normal(k_ln, (2, 4, 10, 13), jnp.float32)
    out_odd = jax.block_until_ready(
        layernorm_channels_first(x_odd, ln.weight, ln.bias, ln.eps))
    ref_odd = _reference_ln_cf(x_odd, ln.weight, ln.bias, ln.eps)
    assert jnp.max(jnp.abs(out_odd - ref_odd)) < 1e-4, "cf LN (odd HW) mismatch"

    xl = jax.random.normal(k_cl, (2, 8, 8, 32), jnp.float32)
    ln_cl = LayerNormPallas(32, eps=1e-6, data_format="channels_last")
    ln_cl.weight = jnp.linspace(0.5, 1.5, 32, dtype=jnp.float32)
    ln_cl.bias = jnp.linspace(-0.2, 0.2, 32, dtype=jnp.float32)
    out_cl = jax.block_until_ready(ln_cl(xl))
    ref_cl = _reference_ln_cl(xl, ln_cl.weight, ln_cl.bias, ln_cl.eps)
    assert jnp.max(jnp.abs(out_cl - ref_cl)) < 1e-4, "channels_last LN mismatch"

    # --- full re_head forward ------------------------------------------------
    Nb, Hs, Ws = 2, 16, 16
    ks = jax.random.split(k_in, 3)
    fuse_4 = jax.random.normal(ks[0], (Nb, 48, Hs, Ws), jnp.float32)
    fuse_8 = jax.random.normal(ks[1], (Nb, 96, Hs, Ws), jnp.float32)
    fuse_16 = jax.random.normal(ks[2], (Nb, 384, Hs, Ws), jnp.float32)

    head = ReHeadPallas(k_par)
    re_4, re_8, re_16 = head(fuse_4, fuse_8, fuse_16)
    jax.block_until_ready((re_4, re_8, re_16))

    assert re_4.shape == (Nb, 3, Hs - 2, Ws - 2)
    assert re_8.shape == (Nb, 3, Hs - 2, Ws - 2)
    assert re_16.shape == (Nb, 3, Hs - 2, Ws - 2)

    for got, inp, name in ((re_4, fuse_4, "4"), (re_8, fuse_8, "8"),
                           (re_16, fuse_16, "16")):
        want = _reference_head(inp, head.params[name])
        assert jnp.max(jnp.abs(got - want)) < 5e-4, f"re_head_{name} mismatch"

    print("KERNEL_OK")
</pallas_src>

<mosaic_0001>
module attributes {stable_mosaic.version = 11 : i64} {
  func.func @_layernorm_cf_kernel(%arg0: i32, %arg1: i32, %arg2: memref<1x4x256xf32, #tpu.memory_space<vmem>>, %arg3: memref<4x1xf32, #tpu.memory_space<vmem>>, %arg4: memref<4x1xf32, #tpu.memory_space<vmem>>, %arg5: memref<1x4x256xf32, #tpu.memory_space<vmem>>) attributes {dimension_semantics = [#tpu.dimension_semantics<parallel>, #tpu.dimension_semantics<parallel>], iteration_bounds = array<i64: 2, 1>, scalar_prefetch = 0 : i64, scratch_operands = 0 : i64, tpu.core_type = #tpu.core_type<tc>, window_params = [{transform_indices = @transform_0, window_bounds = array<i64: 1, 4, 256>}, {pipeline_mode = #tpu.pipeline_mode<synchronous>, transform_indices = @transform_1, window_bounds = array<i64: 4, 1>}, {pipeline_mode = #tpu.pipeline_mode<synchronous>, transform_indices = @transform_2, window_bounds = array<i64: 4, 1>}, {transform_indices = @transform_3, window_bounds = array<i64: 1, 4, 256>}]} {
    %c0 = arith.constant 0 : index
    %c0_0 = arith.constant 0 : index
    %c0_1 = arith.constant 0 : index
    %0 = vector.load %arg2[%c0, %c0_0, %c0_1] : memref<1x4x256xf32, #tpu.memory_space<vmem>>, vector<1x4x256xf32>
    %cst = arith.constant dense<0.000000e+00> : vector<1x256xf32>
    %1 = vector.multi_reduction <add>, %0, %cst [1] : vector<1x4x256xf32> to vector<1x256xf32>
    %2 = vector.shape_cast %1 : vector<1x256xf32> to vector<1x1x256xf32>
    %cst_2 = arith.constant 2.500000e-01 : f32
    %3 = vector.broadcast %cst_2 : f32 to vector<1x1x256xf32>
    %4 = arith.mulf %2, %3 : vector<1x1x256xf32>
    %5 = vector.broadcast %4 : vector<1x1x256xf32> to vector<1x4x256xf32>
    %6 = arith.subf %0, %5 : vector<1x4x256xf32>
    %7 = arith.mulf %6, %6 : vector<1x4x256xf32>
    %cst_3 = arith.constant dense<0.000000e+00> : vector<1x256xf32>
    %8 = vector.multi_reduction <add>, %7, %cst_3 [1] : vector<1x4x256xf32> to vector<1x256xf32>
    %9 = vector.shape_cast %8 : vector<1x256xf32> to vector<1x1x256xf32>
    %cst_4 = arith.constant 2.500000e-01 : f32
    %10 = vector.broadcast %cst_4 : f32 to vector<1x1x256xf32>
    %11 = arith.mulf %9, %10 : vector<1x1x256xf32>
    %cst_5 = arith.constant 9.99999997E-7 : f32
    %12 = vector.broadcast %cst_5 : f32 to vector<1x1x256xf32>
    %13 = arith.addf %11, %12 : vector<1x1x256xf32>
    %14 = math.rsqrt %13 : vector<1x1x256xf32>
    %c0_6 = arith.constant 0 : index
    %c0_7 = arith.constant 0 : index
    %15 = vector.load %arg3[%c0_6, %c0_7] : memref<4x1xf32, #tpu.memory_space<vmem>>, vector<4x1xf32>
    %16 = vector.shape_cast %15 : vector<4x1xf32> to vector<1x4x1xf32>
    %c0_8 = arith.constant 0 : index
    %c0_9 = arith.constant 0 : index
    %17 = vector.load %arg4[%c0_8, %c0_9] : memref<4x1xf32, #tpu.memory_space<vmem>>, vector<4x1xf32>
    %18 = vector.shape_cast %17 : vector<4x1xf32> to vector<1x4x1xf32>
    %19 = vector.broadcast %14 : vector<1x1x256xf32> to vector<1x4x256xf32>
    %20 = arith.mulf %6, %19 : vector<1x4x256xf32>
    %21 = vector.broadcast %16 : vector<1x4x1xf32> to vector<1x4x256xf32>
    %22 = arith.mulf %20, %21 : vector<1x4x256xf32>
    %23 = vector.broadcast %18 : vector<1x4x1xf32> to vector<1x4x256xf32>
    %24 = arith.addf %22, %23 : vector<1x4x256xf32>
    %c0_10 = arith.constant 0 : index
    %c0_11 = arith.constant 0 : index
    %c0_12 = arith.constant 0 : index
    %25 = vector.load %arg5[%c0_10, %c0_11, %c0_12] : memref<1x4x256xf32, #tpu.memory_space<vmem>>, vector<1x4x256xf32>
    tpu.vector_store %arg5[%c0_10, %c0_11, %c0_12], %24 {strides = array<i32>} : memref<1x4x256xf32, #tpu.memory_space<vmem>>, vector<1x4x256xf32>,
    return
  }
  func.func @transform_0(%arg0: i32, %arg1: i32) -> (i32, i32, i32) {
    %c0_i32 = arith.constant 0 : i32
    %c0_i32_0 = arith.constant 0 : i32
    return %arg0, %c0_i32, %arg1 : i32, i32, i32
  }
  func.func @transform_1(%arg0: i32, %arg1: i32) -> (i32, i32) {
    %c0_i32 = arith.constant 0 : i32
    %c0_i32_0 = arith.constant 0 : i32
    %c0_i32_1 = arith.constant 0 : i32
    return %c0_i32, %c0_i32_0 : i32, i32
  }
  func.func @transform_2(%arg0: i32, %arg1: i32) -> (i32, i32) {
    %c0_i32 = arith.constant 0 : i32
    %c0_i32_0 = arith.constant 0 : i32
    %c0_i32_1 = arith.constant 0 : i32
    return %c0_i32, %c0_i32_0 : i32, i32
  }
  func.func @transform_3(%arg0: i32, %arg1: i32) -> (i32, i32, i32) {
    %c0_i32 = arith.constant 0 : i32
    %c0_i32_0 = arith.constant 0 : i32
    return %arg0, %c0_i32, %arg1 : i32, i32, i32
  }
}

</mosaic_0001>

<llo_original>
// kernel: tpu_custom_call.1
$region0: #{tpu_custom_call.1}
  #allocation0 [shape = 'u32[]', space=smem, size = 0x4, offset = 0x4, fixed_abs, tag = 'smem constant byte address 0x4 - core index']
  #allocation1 [shape = 'u32[144,128]{1,0:T(1,128)}', space=vmem, size = 0x12000, scoped, tag = 'internal scratch']
  %s0 = inlined_call_operand.hbm [shape: f32[2,4,256], index: 0, kind: input, shape index: {}]
  %s1 = inlined_call_operand.vmem [shape: f32[4,1], index: 1, kind: input, shape index: {}]
  %s2 = inlined_call_operand.vmem [shape: f32[4,1], index: 2, kind: input, shape index: {}]
  %s3 = inlined_call_operand.hbm [shape: f32[2,4,256], index: 3, kind: output, shape index: {}]
  %s4 = sld [smem:[#allocation0]]
  $region49: #{tpu_custom_call.1} parent=0
    _
  %s6 = ssub.s32 1, %s4
  %s7 = scalar_select 0, %s6, %s4
  $region1: #{tpu_custom_call.1} parent=0
    #allocation2 [shape = 'u8[8192]{0}', space=vmem, size = 0x2000, scoped, tag = 'input window, operand 0']
    #allocation3 [shape = 's32[2]{0}', space=sflag, size = 0x8, scoped, tag = 'scoped memory for tpu_custom_call.1']
    #allocation4 [shape = 's32[2]{0}', space=sflag, size = 0x8, scoped, tag = 'scoped memory for tpu_custom_call.1']
    #allocation5 [shape = 'u8[8192]{0}', space=vmem, size = 0x2000, scoped, tag = 'output window, operand 0']
    %8 = vsyncpa [#allocation3], 0
    %s9 = scalar_lea.sflag [#allocation3], 1
    %10 = vsyncpa %s9, 0
    %11 = vsyncpa [#allocation4], 0
    %s12 = scalar_lea.sflag [#allocation4], 1
    %13 = vsyncpa %s12, 0
    loop: start=0, step=1, limit=4
    $region2: #{tpu_custom_call.1} parent=1 // loop_pre_header
      _
    $region3: #{tpu_custom_call.1} parent=1 // loop_header
      %s15 = sphi 0, %s19
      %p16 = scmp.ge.s32.totalorder %s15, 4
      %s22 = sphi 0, %s34
      %s23 = sphi 0, %s30
      %s24 = sphi 0, %s22
      %s25 = sphi 0, %s23
      %s26 = sphi 0, %s24
      %s27 = sphi 0, %s25
      %s39 = sphi 0, %s41
      %s42 = sphi 0, %s39
      %s43 = sphi 0, %s42
      %s59 = sphi 0, %s43
      %s63 = sphi 0, %s63
      %s65 = sphi 0, %s63
      %s66 = sphi 0, %s65
      %s80 = sphi 0, %s66
      %s84 = sphi 0, %s84
      %s86 = sphi 0, %s84
      %s87 = sphi 0, %s86
      %s101 = sphi 0, %s87
      %s109 = sphi 0, %s111
      %s112 = sphi 0, %s109
      %s113 = sphi 0, %s112
      %s129 = sphi 0, %s113
    $region4: #{tpu_custom_call.1} parent=1 // loop_header_branch
      %18 = sbr.rel (%p16) target = $region8
    $region5: #{tpu_custom_call.1} parent=1 // loop_body
      %s20 = ssub.s32 %s15, 1
      %s21 = ssub.s32 %s15, 2
      %s28 = sadd.s32 1, %s23
      %p29 = scmp.ge.s32.totalorder %s28, 1
      %s30 = scalar_select %p29, 0, %s28
      %s31 = sadd.s32 1, %s22
      %s32 = scalar_select %p29, %s31, %s22
      %p33 = scmp.ge.s32.totalorder %s32, 2
      %s34 = scalar_select %p33, 0, %s32
      %s35 = ssub.s32 %s22, %s34
      %s36 = ssub.s32 %s23, %s30
      %s37 = sor.u32 %s35, %s36
      %p38 = scmp.eq.s32.totalorder %s37, 0
      %s40 = sadd.s32 %s39, 1
      %s41 = scalar_select %p38, %s39, %s40
      %p44 = pneg %p38
      %p45 = scmp.eq.s32.totalorder %s15, 1
      %p46 = por %p44, %p45
      %p47 = scmp.ne.s32.totalorder %s39, %s42
      %p48 = scmp.eq.s32.totalorder %s15, 0
      %p49 = por %p47, %p48
      %p50 = scmp.ne.s32.totalorder %s39, %s42
      %p51 = scmp.eq.s32.totalorder %s20, 1
      %p52 = por %p50, %p51
      %p53 = scmp.ne.s32.totalorder %s42, %s43
      %p54 = scmp.eq.s32.totalorder %s20, 0
      %p55 = por %p53, %p54
      %p56 = scmp.ne.s32.totalorder %s42, %s43
      %p57 = scmp.eq.s32.totalorder %s21, 1
      %p58 = por %p56, %p57
      %p60 = scmp.ne.s32.totalorder %s43, %s59
      %p61 = scmp.eq.s32.totalorder %s21, 0
      %p62 = por %p60, %p61
      %s64 = sadd.s32 %s63, 1
      %p67 = scmp.eq.s32.totalorder %s15, 1
      %p68 = scmp.ne.s32.totalorder %s63, %s65
      %p69 = scmp.eq.s32.totalorder %s15, 0
      %p70 = por %p68, %p69
      %p71 = scmp.ne.s32.totalorder %s63, %s65
      %p72 = scmp.eq.s32.totalorder %s20, 1
      %p73 = por %p71, %p72
      %p74 = scmp.ne.s32.totalorder %s65, %s66
      %p75 = scmp.eq.s32.totalorder %s20, 0
      %p76 = por %p74, %p75
      %p77 = scmp.ne.s32.totalorder %s65, %s66
      %p78 = scmp.eq.s32.totalorder %s21, 1
      %p79 = por %p77, %p78
      %p81 = scmp.ne.s32.totalorder %s66, %s80
      %p82 = scmp.eq.s32.totalorder %s21, 0
      %p83 = por %p81, %p82
      %s85 = sadd.s32 %s84, 1
      %p88 = scmp.eq.s32.totalorder %s15, 1
      %p89 = scmp.ne.s32.totalorder %s84, %s86
      %p90 = scmp.eq.s32.totalorder %s15, 0
      %p91 = por %p89, %p90
      %p92 = scmp.ne.s32.totalorder %s84, %s86
      %p93 = scmp.eq.s32.totalorder %s20, 1
      %p94 = por %p92, %p93
      %p95 = scmp.ne.s32.totalorder %s86, %s87
      %p96 = scmp.eq.s32.totalorder %s20, 0
      %p97 = por %p95, %p96
      %p98 = scmp.ne.s32.totalorder %s86, %s87
      %p99 = scmp.eq.s32.totalorder %s21, 1
      %p100 = por %p98, %p99
      %p102 = scmp.ne.s32.totalorder %s87, %s101
      %p103 = scmp.eq.s32.totalorder %s21, 0
      %p104 = por %p102, %p103
      %s105 = ssub.s32 %s22, %s34
      %s106 = ssub.s32 %s23, %s30
      %s107 = sor.u32 %s105, %s106
      %p108 = scmp.eq.s32.totalorder %s107, 0
      %s110 = sadd.s32 %s109, 1
      %s111 = scalar_select %p108, %s109, %s110
      %p114 = pneg %p108
      %p115 = scmp.eq.s32.totalorder %s15, 1
      %p116 = por %p114, %p115
      %p117 = scmp.ne.s32.totalorder %s109, %s112
      %p118 = scmp.eq.s32.totalorder %s15, 0
      %p119 = por %p117, %p118
      %p120 = scmp.ne.s32.totalorder %s109, %s112
      %p121 = scmp.eq.s32.totalorder %s20, 1
      %p122 = por %p120, %p121
      %p123 = scmp.ne.s32.totalorder %s112, %s113
      %p124 = scmp.eq.s32.totalorder %s20, 0
      %p125 = por %p123, %p124
      %p126 = scmp.ne.s32.totalorder %s112, %s113
      %p127 = scmp.eq.s32.totalorder %s21, 1
      %p128 = por %p126, %p127
      %p130 = scmp.ne.s32.totalorder %s113, %s129
      %p131 = scmp.eq.s32.totalorder %s21, 0
      %p132 = por %p130, %p131
      %p133 = scmp.le.s32.totalorder 1, %s15
      %p134 = scmp.lt.s32.totalorder %s15, 3
      %p135 = pnand %p133, %p134
      %p136 = pneg %p135
      // Predicated region
      $region9: #{tpu_custom_call.1} parent=5 // pred_check
        _
      $region10: #{tpu_custom_call.1} parent=5 // pred_check_branch
        %138 = sbr.rel (%p135) target = $region12
      $region11: #{tpu_custom_call.1} parent=5 // pred_region
        %s139 = ssub.s32 %s15, 1
        // Predicated region
        $region13: #{tpu_custom_call.1} parent=11 // pred_check
          %p140 = pneg %p76
        $region14: #{tpu_custom_call.1} parent=11 // pred_check_branch
          %142 = sbr.rel (%p140) target = $region16
        $region15: #{tpu_custom_call.1} parent=11 // pred_region
          _
        $region16: #{tpu_custom_call.1} parent=11 // pred_fallthru
          _
        // Predicated region
        $region17: #{tpu_custom_call.1} parent=11 // pred_check
          %p143 = pneg %p97
        $region18: #{tpu_custom_call.1} parent=11 // pred_check_branch
          %145 = sbr.rel (%p143) target = $region20
        $region19: #{tpu_custom_call.1} parent=11 // pred_region
          _
        $region20: #{tpu_custom_call.1} parent=11 // pred_fallthru
          _
      $region12: #{tpu_custom_call.1} parent=5 // pred_fallthru
        _
      %p146 = scmp.lt.s32.totalorder %s15, 2
      // Predicated region
      $region21: #{tpu_custom_call.1} parent=5 // pred_check
        %p147 = pneg %p146
      $region22: #{tpu_custom_call.1} parent=5 // pred_check_branch
        %149 = sbr.rel (%p147) target = $region24
      $region23: #{tpu_custom_call.1} parent=5 // pred_region
        // Predicated region
        $region25: #{tpu_custom_call.1} parent=23 // pred_check
          %p150 = pneg %p49
        $region26: #{tpu_custom_call.1} parent=23 // pred_check_branch
          %152 = sbr.rel (%p150) target = $region28
        $region27: #{tpu_custom_call.1} parent=23 // pred_region
          %s153 = sand.u32 %s39, 1
          %s154 = scalar_lea.sflag [#allocation3], %s153
          %s155 = sand.u32 %s39, 1
          %s156 = smul.addr %s155, 8
          %s157 = scalar_lea.vmem [#allocation2], %s156
          %s158 = smul.u32 2, %s23
          %s160 = ssub.s32 128, 128
          %161 = vsyncadd %s154, %s160
          %s162 = smul.addr %s22, 2
          %s163 = sadd.s32 %s158, %s162
          %s164 = smul.addr %s163, 64
          %s165 = scalar_lea.hbm %s0, %s164
          %s167 = sshll.u32 %s157, 4
          %s168 = int_to_ptr.vmem [resolvable:$true] %s167
          %170 = dma.hbm_to_vmem [thread:$0]  %s165, 128, %s168, %s154
        $region28: #{tpu_custom_call.1} parent=23 // pred_fallthru
          _
      $region24: #{tpu_custom_call.1} parent=5 // pred_fallthru
        _
      %p171 = scmp.le.s32.totalorder 1, %s15
      %p172 = scmp.lt.s32.totalorder %s15, 3
      %p173 = pnand %p171, %p172
      %p174 = pneg %p173
      // Predicated region
      $region29: #{tpu_custom_call.1} parent=5 // pred_check
        _
      $region30: #{tpu_custom_call.1} parent=5 // pred_check_branch
        %176 = sbr.rel (%p173) target = $region32
      $region31: #{tpu_custom_call.1} parent=5 // pred_region
        %s177 = ssub.s32 %s15, 1
        %s178 = sand.u32 %s42, 1
        %s179 = scalar_lea.sflag [#allocation3], %s178
        %s180 = sand.u32 %s42, 1
        %s181 = smul.addr %s180, 8
        %s182 = scalar_lea.vmem [#allocation2], %s181
        // Predicated region
        $region33: #{tpu_custom_call.1} parent=31 // pred_check
          %p183 = pneg %p55
        $region34: #{tpu_custom_call.1} parent=31 // pred_check_branch
          %185 = sbr.rel (%p183) target = $region36
        $region35: #{tpu_custom_call.1} parent=31 // pred_region
          %186 = dma.done %s179, 128
        $region36: #{tpu_custom_call.1} parent=31 // pred_fallthru
          _
        %s187 = sand.u32 %s42, 1
        %s188 = scalar_lea.sflag [#allocation3], %s187
        %s189 = sand.u32 %s42, 1
        %s190 = smul.addr %s189, 8
        %s191 = scalar_lea.vmem [#allocation2], %s190
        %p192 = pneg %p55
        %p193 = pneg %p52
        %p194 = pneg %p76
        %p195 = pneg %p73
        %p196 = pneg %p97
        %p197 = pneg %p94
        %p198 = pneg %p125
        %p199 = pneg %p122
        %s200 = sand.u32 %s112, 1
        %s201 = scalar_lea.sflag [#allocation4], %s200
        %s202 = sand.u32 %s112, 1
        %s203 = smul.addr %s202, 8
        %s204 = scalar_lea.vmem [#allocation5], %s203
        %s205 = smul.u32 2, %s25
        %s206 = smul.u32 2, %s25
        %v207 = vld [vmem:[%s182] sm:$0xff]
        %v209 = vcombine.high %v207, %v207
        %vm211 = vcmask 1043456
        %v212 = vsel %vm211, %v207, 0.0
        %v213 = vrot.slane %v212, 4
        %v214 = vadd.f32 %v212, %v213
        %v215 = vrot.slane %v214, 2
        %v216 = vadd.f32 %v214, %v215
        %v217 = vrot.slane %v216, 1
        %v218 = vadd.f32 %v216, %v217
        %v219 = vsel %vm211, %v209, 0.0
        %v220 = vrot.slane %v219, 4
        %v221 = vadd.f32 %v219, %v220
        %v222 = vrot.slane %v221, 2
        %v223 = vadd.f32 %v221, %v222
        %v224 = vrot.slane %v223, 1
        %v225 = vadd.f32 %v223, %v224
        %v226 = vmul.f32 %v218, 0.25
        %v227 = vmul.f32 %v225, 0.25
        %v230 = vcombine.low %v226, %v227
        %v232 = vsub.f32 %v207, %v230
        %v233 = vmul.f32 %v232, %v232
        %v235 = vcombine.high %v233, %v233
        %v237 = vsel %vm211, %v233, 0.0
        %v238 = vrot.slane %v237, 4
        %v239 = vadd.f32 %v237, %v238
        %v240 = vrot.slane %v239, 2
        %v241 = vadd.f32 %v239, %v240
        %v242 = vrot.slane %v241, 1
        %v243 = vadd.f32 %v241, %v242
        %v244 = vsel %vm211, %v235, 0.0
        %v245 = vrot.slane %v244, 4
        %v246 = vadd.f32 %v244, %v245
        %v247 = vrot.slane %v246, 2
        %v248 = vadd.f32 %v246, %v247
        %v249 = vrot.slane %v248, 1
        %v250 = vadd.f32 %v248, %v249
        %v251 = vmul.f32 %v243, 0.25
        %v252 = vmul.f32 %v250, 0.25
        %v253 = vadd.f32 %v251, 1e-06
        %v254 = vadd.f32 %v252, 1e-06
        %v255 = vrsqrt.pop %v253
        %v256 = vrsqrt.pop %v254
        %v257 = vld [vmem:[%s1] sm:$0xf]
        %v258 = vld [vmem:[%s2] sm:$0xf]
        %v261 = vcombine.low %v255, %v256
        %v263 = vmul.f32 %v232, %v261
        %265 = vset.pattern.permute.xlu0 0
        %266 = vperm.xlu0 %265, %v257
        %v267 = vpop.permute.xlu0 %266
        %v269 = vunpack.c.l.s4 839922192
        %v270 = vunpack.c.0.s8 %v269
        %v271 = vlaneseq
        %v272 = vshrl.u32 %v271, 7
        %v273 = vsub.s32 %v270, %v272
        %v274 = vrot.slane %v267, %v273
        %v276 = vmul.f32 %v263, %v274
        %278 = vset.pattern.permute.xlu0 0
        %279 = vperm.xlu0 %278, %v258
        %v280 = vpop.permute.xlu0 %279
        %v282 = vunpack.c.l.s4 839922192
        %v283 = vunpack.c.0.s8 %v282
        %v284 = vlaneseq
        %v285 = vshrl.u32 %v284, 7
        %v286 = vsub.s32 %v283, %v285
        %v287 = vrot.slane %v280, %v286
        %v289 = vadd.f32 %v276, %v287
        %290 = vst [vmem:[%s204] sm:$0xff] %v289
        %s291 = sand.u32 %s112, 1
        %s292 = scalar_lea.sflag [#allocation4], %s291
        %s293 = sand.u32 %s112, 1
        %s294 = smul.addr %s293, 8
        %s295 = scalar_lea.vmem [#allocation5], %s294
        // Predicated region
        $region37: #{tpu_custom_call.1} parent=31 // pred_check
          %p296 = pneg %p122
        $region38: #{tpu_custom_call.1} parent=31 // pred_check_branch
          %298 = sbr.rel (%p296) target = $region40
        $region39: #{tpu_custom_call.1} parent=31 // pred_region
          %s299 = smul.u32 2, %s25
          %s301 = ssub.s32 128, 128
          %302 = vsyncadd %s292, %s301
          %s303 = smul.addr %s24, 2
          %s304 = sadd.s32 %s299, %s303
          %s305 = smul.addr %s304, 64
          %s306 = scalar_lea.hbm %s3, %s305
          %s308 = sshll.u32 %s295, 4
          %s309 = int_to_ptr.vmem [resolvable:$true] %s308
          %311 = dma.vmem_to_hbm [thread:$0]  %s309, 128, %s306, %s292
        $region40: #{tpu_custom_call.1} parent=31 // pred_fallthru
          _
      $region32: #{tpu_custom_call.1} parent=5 // pred_fallthru
        _
      %p312 = scmp.le.s32.totalorder 2, %s15
      // Predicated region
      $region41: #{tpu_custom_call.1} parent=5 // pred_check
        %p313 = pneg %p312
      $region42: #{tpu_custom_call.1} parent=5 // pred_check_branch
        %315 = sbr.rel (%p313) target = $region44
      $region43: #{tpu_custom_call.1} parent=5 // pred_region
        %s316 = ssub.s32 %s15, 2
        // Predicated region
        $region45: #{tpu_custom_call.1} parent=43 // pred_check
          %p317 = pneg %p128
        $region46: #{tpu_custom_call.1} parent=43 // pred_check_branch
          %319 = sbr.rel (%p317) target = $region48
        $region47: #{tpu_custom_call.1} parent=43 // pred_region
          %s320 = sand.u32 %s113, 1
          %s321 = scalar_lea.sflag [#allocation4], %s320
          %s322 = sand.u32 %s113, 1
          %s323 = smul.addr %s322, 8
          %s324 = scalar_lea.vmem [#allocation5], %s323
          %325 = dma.done %s321, 128
        $region48: #{tpu_custom_call.1} parent=43 // pred_fallthru
          _
      $region44: #{tpu_custom_call.1} parent=5 // pred_fallthru
        _
    $region6: #{tpu_custom_call.1} parent=1 // loop_footer
      %s19 = sadd.s32 1, %s15
    $region7: #{tpu_custom_call.1} parent=1 // loop_footer_branch
      %14 = sbr.rel target = $region3
    $region8: #{tpu_custom_call.1} parent=1 // loop_exit
      _
    %326 = vsyncpa [#allocation3], 1
    %s327 = scalar_lea.sflag [#allocation3], 1
    %328 = vsyncpa %s327, 1
    %329 = vsyncpa [#allocation4], 1
    %s330 = scalar_lea.sflag [#allocation4], 1
    %331 = vsyncpa %s330, 1

</llo_original>
